<compile_context>
chip_gen: v7x
topology: tpu7x:2x2x1
jax: 0.10.0
libtpu: 0.0.40
codegen_flags: <defaults>
</compile_context>

<pallas_src>
import jax
import jax.numpy as jnp
from jax.experimental import pallas as pl
from jax.experimental.pallas import tpu as pltpu


def _mlp_kernel(x_ref, w1_ref, b1_ref, w2_ref, b2_ref, w3_ref, b3_ref, o_ref):
    # x_ref: [in_features, TB]  (batch on lanes)
    x = x_ref[...]

    # Layer 1: h1 = relu(W1 @ x + b1)   -> [h1, TB]
    h1 = jnp.dot(w1_ref[...], x, preferred_element_type=jnp.float32)
    h1 = jnp.maximum(h1 + b1_ref[...], 0.0)  # b1 [h1,1] broadcasts over lanes
    # TODO(synk): training-mode dropout (Bernoulli mask via pltpu.prng_*) not emitted; eval semantics used.

    # Layer 2: h2 = relu(W2 @ h1 + b2)  -> [h2, TB]
    h2 = jnp.dot(w2_ref[...], h1, preferred_element_type=jnp.float32)
    h2 = jnp.maximum(h2 + b2_ref[...], 0.0)

    # Layer 3 (out_features = 1): VPU mul + sublane reduce, skip the MXU.
    out = jnp.sum(h2 * w3_ref[...], axis=0, keepdims=True) + b3_ref[0]  # [1, TB]
    o_ref[...] = out.astype(o_ref.dtype)


def regmodel_forward(x, w1, b1, w2, b2, w3, b3, *, tile_b=512):
    """Forward pass of RegModel (eval mode).

    x : [B, input_size]            (PyTorch activation layout)
    w1: [h1, input_size], b1: [h1] (PyTorch nn.Linear layout)
    w2: [h2, h1],         b2: [h2]
    w3: [1, h2],          b3: [1]
    returns [B, 1] float32
    """
    B, in_features = x.shape
    h1 = w1.shape[0]
    h2 = w2.shape[0]

    # Transposed, lane-dense layout: batch on the 128-lane axis.
    xt = x.astype(jnp.float32).T  # [in_features, B]

    # Batch tile: full batch if small, otherwise a 128-aligned tile (pad batch).
    tb = B if B < tile_b else tile_b
    n_blocks = pl.cdiv(B, tb)
    Bp = n_blocks * tb
    if Bp != B:
        xt = jnp.pad(xt, ((0, 0), (0, Bp - B)))

    # Column-vector biases broadcast over lanes inside the kernel.
    b1c = b1.reshape(h1, 1).astype(jnp.float32)
    b2c = b2.reshape(h2, 1).astype(jnp.float32)
    w3c = w3.reshape(h2, 1).astype(jnp.float32)   # column for VPU mul + reduce
    b3s = b3.reshape(1).astype(jnp.float32)       # scalar -> SMEM

    # NOTE: for large-batch mem-bound operation on v6e/v7x, cast xt/w1/w2 to
    # bfloat16 here (accumulation stays f32 via preferred_element_type).
    out_t = pl.pallas_call(
        _mlp_kernel,
        out_shape=jax.ShapeDtypeStruct((1, Bp), jnp.float32),
        grid=(n_blocks,),
        in_specs=[
            pl.BlockSpec((in_features, tb), lambda i: (0, i)),   # x tile (lane-dense)
            pl.BlockSpec((h1, in_features), lambda i: (0, 0)),   # W1 resident
            pl.BlockSpec((h1, 1), lambda i: (0, 0)),             # b1 resident
            pl.BlockSpec((h2, h1), lambda i: (0, 0)),            # W2 resident
            pl.BlockSpec((h2, 1), lambda i: (0, 0)),             # b2 resident
            pl.BlockSpec((h2, 1), lambda i: (0, 0)),             # w3 resident
            pl.BlockSpec(memory_space=pltpu.MemorySpace.SMEM),   # b3 scalar
        ],
        out_specs=pl.BlockSpec((1, tb), lambda i: (0, i)),       # lane-dense output
        compiler_params=pltpu.CompilerParams(
            dimension_semantics=("parallel",)),
    )(xt, w1, b1c, w2, b2c, w3c, b3s)

    return out_t[:, :B].T  # [B, 1]


def init_params(key, input_size, hidden1, hidden2):
    """Deterministic init matching nn.Linear shapes ([out, in] weight, [out] bias)."""
    ks = jax.random.split(key, 6)

    def linear(kw, kb, fan_in, fan_out):
        bound = 1.0 / jnp.sqrt(fan_in)
        w = jax.random.uniform(kw, (fan_out, fan_in), jnp.float32, -bound, bound)
        b = jax.random.uniform(kb, (fan_out,), jnp.float32, -bound, bound)
        return w, b

    w1, b1 = linear(ks[0], ks[1], input_size, hidden1)
    w2, b2 = linear(ks[2], ks[3], hidden1, hidden2)
    w3, b3 = linear(ks[4], ks[5], hidden2, 1)
    return w1, b1, w2, b2, w3, b3


if __name__ == "__main__":
    key = jax.random.PRNGKey(0)
    kx, kp = jax.random.split(key)

    batch, input_size, hidden1, hidden2 = 8, 32, 64, 32
    x = jax.random.normal(kx, (batch, input_size), jnp.float32)
    params = init_params(kp, input_size, hidden1, hidden2)

    out = regmodel_forward(x, *params)
    out = jax.block_until_ready(out)

    # Pure-JAX reference (same math, eval-mode dropout = identity).
    w1, b1, w2, b2, w3, b3 = params
    ref = jnp.maximum(x @ w1.T + b1, 0.0)
    ref = jnp.maximum(ref @ w2.T + b2, 0.0)
    ref = ref @ w3.T + b3
    assert out.shape == (batch, 1)
    assert jnp.allclose(out, ref, atol=1e-4, rtol=1e-4)

    print("KERNEL_OK")
</pallas_src>

<mosaic_0001>
module attributes {stable_mosaic.version = 11 : i64} {
  func.func @_mlp_kernel(%arg0: i32, %arg1: memref<32x8xf32, #tpu.memory_space<vmem>>, %arg2: memref<64x32xf32, #tpu.memory_space<vmem>>, %arg3: memref<64x1xf32, #tpu.memory_space<vmem>>, %arg4: memref<32x64xf32, #tpu.memory_space<vmem>>, %arg5: memref<32x1xf32, #tpu.memory_space<vmem>>, %arg6: memref<32x1xf32, #tpu.memory_space<vmem>>, %arg7: memref<1xf32, #tpu.memory_space<smem>>, %arg8: memref<1x8xf32, #tpu.memory_space<vmem>>) attributes {dimension_semantics = [#tpu.dimension_semantics<parallel>], iteration_bounds = array<i64: 1>, scalar_prefetch = 0 : i64, scratch_operands = 0 : i64, tpu.core_type = #tpu.core_type<tc>, window_params = [{transform_indices = @transform_0, window_bounds = array<i64: 32, 8>}, {pipeline_mode = #tpu.pipeline_mode<synchronous>, transform_indices = @transform_1, window_bounds = array<i64: 64, 32>}, {pipeline_mode = #tpu.pipeline_mode<synchronous>, transform_indices = @transform_2, window_bounds = array<i64: 64, 1>}, {pipeline_mode = #tpu.pipeline_mode<synchronous>, transform_indices = @transform_3, window_bounds = array<i64: 32, 64>}, {pipeline_mode = #tpu.pipeline_mode<synchronous>, transform_indices = @transform_4, window_bounds = array<i64: 32, 1>}, {pipeline_mode = #tpu.pipeline_mode<synchronous>, transform_indices = @transform_5, window_bounds = array<i64: 32, 1>}, {transform_indices = @transform_6, window_bounds = array<i64: 1>}, {transform_indices = @transform_7, window_bounds = array<i64: 1, 8>}]} {
    %c0 = arith.constant 0 : index
    %c0_0 = arith.constant 0 : index
    %0 = vector.load %arg1[%c0, %c0_0] : memref<32x8xf32, #tpu.memory_space<vmem>>, vector<32x8xf32>
    %c0_1 = arith.constant 0 : index
    %c0_2 = arith.constant 0 : index
    %1 = vector.load %arg2[%c0_1, %c0_2] : memref<64x32xf32, #tpu.memory_space<vmem>>, vector<64x32xf32>
    %cst = arith.constant dense<0.000000e+00> : vector<64x8xf32>
    %2 = tpu.matmul %1, %0, %cst {dimension_numbers = #tpu.dot_dimension_numbers<[1], [0], [0], [1], [0, 0, 1, 1], [], []>} : vector<64x32xf32>, vector<32x8xf32>, vector<64x8xf32> -> vector<64x8xf32>
    %c0_3 = arith.constant 0 : index
    %c0_4 = arith.constant 0 : index
    %3 = vector.load %arg3[%c0_3, %c0_4] : memref<64x1xf32, #tpu.memory_space<vmem>>, vector<64x1xf32>
    %4 = vector.broadcast %3 : vector<64x1xf32> to vector<64x8xf32>
    %5 = arith.addf %2, %4 : vector<64x8xf32>
    %cst_5 = arith.constant 0.000000e+00 : f32
    %6 = vector.broadcast %cst_5 : f32 to vector<64x8xf32>
    %7 = arith.maximumf %5, %6 : vector<64x8xf32>
    %c0_6 = arith.constant 0 : index
    %c0_7 = arith.constant 0 : index
    %8 = vector.load %arg4[%c0_6, %c0_7] : memref<32x64xf32, #tpu.memory_space<vmem>>, vector<32x64xf32>
    %cst_8 = arith.constant dense<0.000000e+00> : vector<32x8xf32>
    %9 = tpu.matmul %8, %7, %cst_8 {dimension_numbers = #tpu.dot_dimension_numbers<[1], [0], [0], [1], [0, 0, 1, 1], [], []>} : vector<32x64xf32>, vector<64x8xf32>, vector<32x8xf32> -> vector<32x8xf32>
    %c0_9 = arith.constant 0 : index
    %c0_10 = arith.constant 0 : index
    %10 = vector.load %arg5[%c0_9, %c0_10] : memref<32x1xf32, #tpu.memory_space<vmem>>, vector<32x1xf32>
    %11 = vector.broadcast %10 : vector<32x1xf32> to vector<32x8xf32>
    %12 = arith.addf %9, %11 : vector<32x8xf32>
    %cst_11 = arith.constant 0.000000e+00 : f32
    %13 = vector.broadcast %cst_11 : f32 to vector<32x8xf32>
    %14 = arith.maximumf %12, %13 : vector<32x8xf32>
    %c0_12 = arith.constant 0 : index
    %c0_13 = arith.constant 0 : index
    %15 = vector.load %arg6[%c0_12, %c0_13] : memref<32x1xf32, #tpu.memory_space<vmem>>, vector<32x1xf32>
    %16 = vector.broadcast %15 : vector<32x1xf32> to vector<32x8xf32>
    %17 = arith.mulf %14, %16 : vector<32x8xf32>
    %cst_14 = arith.constant dense<0.000000e+00> : vector<8xf32>
    %18 = vector.multi_reduction <add>, %17, %cst_14 [0] : vector<32x8xf32> to vector<8xf32>
    %19 = vector.shape_cast %18 : vector<8xf32> to vector<1x8xf32>
    %c0_15 = arith.constant 0 : index
    %20 = memref.load %arg7[%c0_15] : memref<1xf32, #tpu.memory_space<smem>>
    %21 = vector.broadcast %20 : f32 to vector<1x8xf32>
    %22 = arith.addf %19, %21 : vector<1x8xf32>
    %c0_16 = arith.constant 0 : index
    %c0_17 = arith.constant 0 : index
    %23 = vector.load %arg8[%c0_16, %c0_17] : memref<1x8xf32, #tpu.memory_space<vmem>>, vector<1x8xf32>
    tpu.vector_store %arg8[%c0_16, %c0_17], %22 {strides = array<i32>} : memref<1x8xf32, #tpu.memory_space<vmem>>, vector<1x8xf32>,
    return
  }
  func.func @transform_0(%arg0: i32) -> (i32, i32) {
    %c0_i32 = arith.constant 0 : i32
    %c0_i32_0 = arith.constant 0 : i32
    return %c0_i32, %arg0 : i32, i32
  }
  func.func @transform_1(%arg0: i32) -> (i32, i32) {
    %c0_i32 = arith.constant 0 : i32
    %c0_i32_0 = arith.constant 0 : i32
    %c0_i32_1 = arith.constant 0 : i32
    return %c0_i32, %c0_i32_0 : i32, i32
  }
  func.func @transform_2(%arg0: i32) -> (i32, i32) {
    %c0_i32 = arith.constant 0 : i32
    %c0_i32_0 = arith.constant 0 : i32
    %c0_i32_1 = arith.constant 0 : i32
    return %c0_i32, %c0_i32_0 : i32, i32
  }
  func.func @transform_3(%arg0: i32) -> (i32, i32) {
    %c0_i32 = arith.constant 0 : i32
    %c0_i32_0 = arith.constant 0 : i32
    %c0_i32_1 = arith.constant 0 : i32
    return %c0_i32, %c0_i32_0 : i32, i32
  }
  func.func @transform_4(%arg0: i32) -> (i32, i32) {
    %c0_i32 = arith.constant 0 : i32
    %c0_i32_0 = arith.constant 0 : i32
    %c0_i32_1 = arith.constant 0 : i32
    return %c0_i32, %c0_i32_0 : i32, i32
  }
  func.func @transform_5(%arg0: i32) -> (i32, i32) {
    %c0_i32 = arith.constant 0 : i32
    %c0_i32_0 = arith.constant 0 : i32
    %c0_i32_1 = arith.constant 0 : i32
    return %c0_i32, %c0_i32_0 : i32, i32
  }
  func.func @transform_6(%arg0: i32) -> i32 {
    %c0_i32 = arith.constant 0 : i32
    %c0_i32_0 = arith.constant 0 : i32
    return %c0_i32 : i32
  }
  func.func @transform_7(%arg0: i32) -> (i32, i32) {
    %c0_i32 = arith.constant 0 : i32
    %c0_i32_0 = arith.constant 0 : i32
    return %c0_i32, %arg0 : i32, i32
  }
}

</mosaic_0001>

<llo_original>
// kernel: tpu_custom_call.1
$region0: #{tpu_custom_call.1}
  #allocation0 [shape = 'u32[]', space=smem, size = 0x4, offset = 0x4, fixed_abs, tag = 'smem constant byte address 0x4 - core index']
  #allocation1 [shape = 'u32[144,128]{1,0:T(1,128)}', space=vmem, size = 0x12000, scoped, tag = 'internal scratch']
  #allocation2 [shape = 'f32[1]{0:T(128)S(6)}', space=smem, size = 0x200, scoped, tag = 'scoped memory for tpu_custom_call.1']
  %s0 = inlined_call_operand.vmem [shape: f32[32,8], index: 0, kind: input, shape index: {}]
  %s1 = inlined_call_operand.vmem [shape: f32[64,32], index: 1, kind: input, shape index: {}]
  %s2 = inlined_call_operand.vmem [shape: f32[64,1], index: 2, kind: input, shape index: {}]
  %s3 = inlined_call_operand.vmem [shape: f32[32,64], index: 3, kind: input, shape index: {}]
  %s4 = inlined_call_operand.vmem [shape: f32[32,1], index: 4, kind: input, shape index: {}]
  %s5 = inlined_call_operand.vmem [shape: f32[32,1], index: 5, kind: input, shape index: {}]
  %s6 = inlined_call_operand.<no memory space> [shape: f32[1], index: 6, kind: input, shape index: {}]
  %s7 = inlined_call_operand.hbm [shape: f32[1,8], index: 7, kind: output, shape index: {}]
  %s8 = sld [smem:[#allocation0]]
  $region38: #{tpu_custom_call.1} parent=0
    _
  %s10 = ssub.s32 1, %s8
  %s11 = scalar_select 0, %s10, %s8
  %12 = sst [smem:[#allocation2]] %s6
  $region1: #{tpu_custom_call.1} parent=0
    #allocation3 [shape = 'u8[512]{0}', space=vmem, size = 0x400, scoped, tag = 'output window, operand 0, single buffered']
    #allocation4 [shape = 's32[1]{0}', space=sflag, size = 0x4, scoped, tag = 'scoped memory for tpu_custom_call.1']
    %13 = vsyncpa [#allocation4], 0
    // Predicated region
    $region2: #{tpu_custom_call.1} parent=1 // pred_check
      _
    $region3: #{tpu_custom_call.1} parent=1 // pred_check_branch
      %15 = sbr.rel (0) target = $region5
    $region4: #{tpu_custom_call.1} parent=1 // pred_region
      _
    $region5: #{tpu_custom_call.1} parent=1 // pred_fallthru
      _
    // Predicated region
    $region6: #{tpu_custom_call.1} parent=1 // pred_check
      _
    $region7: #{tpu_custom_call.1} parent=1 // pred_check_branch
      %17 = sbr.rel (0) target = $region9
    $region8: #{tpu_custom_call.1} parent=1 // pred_region
      _
    $region9: #{tpu_custom_call.1} parent=1 // pred_fallthru
      _
    // Predicated region
    $region10: #{tpu_custom_call.1} parent=1 // pred_check
      _
    $region11: #{tpu_custom_call.1} parent=1 // pred_check_branch
      %19 = sbr.rel (0) target = $region13
    $region12: #{tpu_custom_call.1} parent=1 // pred_region
      _
    $region13: #{tpu_custom_call.1} parent=1 // pred_fallthru
      _
    // Predicated region
    $region14: #{tpu_custom_call.1} parent=1 // pred_check
      _
    $region15: #{tpu_custom_call.1} parent=1 // pred_check_branch
      %21 = sbr.rel (0) target = $region17
    $region16: #{tpu_custom_call.1} parent=1 // pred_region
      _
    $region17: #{tpu_custom_call.1} parent=1 // pred_fallthru
      _
    // Predicated region
    $region18: #{tpu_custom_call.1} parent=1 // pred_check
      _
    $region19: #{tpu_custom_call.1} parent=1 // pred_check_branch
      %23 = sbr.rel (0) target = $region21
    $region20: #{tpu_custom_call.1} parent=1 // pred_region
      _
    $region21: #{tpu_custom_call.1} parent=1 // pred_fallthru
      _
    // Predicated region
    $region22: #{tpu_custom_call.1} parent=1 // pred_check
      _
    $region23: #{tpu_custom_call.1} parent=1 // pred_check_branch
      %25 = sbr.rel (0) target = $region25
    $region24: #{tpu_custom_call.1} parent=1 // pred_region
      _
    $region25: #{tpu_custom_call.1} parent=1 // pred_fallthru
      _
    // Predicated region
    $region26: #{tpu_custom_call.1} parent=1 // pred_check
      _
    $region27: #{tpu_custom_call.1} parent=1 // pred_check_branch
      %27 = sbr.rel (0) target = $region29
    $region28: #{tpu_custom_call.1} parent=1 // pred_region
      _
    $region29: #{tpu_custom_call.1} parent=1 // pred_fallthru
      _
    %v28 = vld [vmem:[%s0] sm:$0xff]
    %v29 = vld [vmem:[%s0 + $0x8] sm:$0xff]
    %v30 = vld [vmem:[%s0 + $0x10] sm:$0xff]
    %v31 = vld [vmem:[%s0 + $0x18] sm:$0xff]
    %v32 = vld [vmem:[%s1] sm:$0xff]
    %v33 = vld [vmem:[%s1 + $0x8] sm:$0xff]
    %v34 = vld [vmem:[%s1 + $0x10] sm:$0xff]
    %v35 = vld [vmem:[%s1 + $0x18] sm:$0xff]
    %v36 = vld [vmem:[%s1 + $0x20] sm:$0xff]
    %v37 = vld [vmem:[%s1 + $0x28] sm:$0xff]
    %v38 = vld [vmem:[%s1 + $0x30] sm:$0xff]
    %v39 = vld [vmem:[%s1 + $0x38] sm:$0xff]
    %v40 = vld [vmem:[%s2] sm:$0xff]
    %v41 = vld [vmem:[%s2 + $0x8] sm:$0xff]
    %v42 = vld [vmem:[%s2 + $0x10] sm:$0xff]
    %v43 = vld [vmem:[%s2 + $0x18] sm:$0xff]
    %v44 = vld [vmem:[%s2 + $0x20] sm:$0xff]
    %v45 = vld [vmem:[%s2 + $0x28] sm:$0xff]
    %v46 = vld [vmem:[%s2 + $0x30] sm:$0xff]
    %v47 = vld [vmem:[%s2 + $0x38] sm:$0xff]
    %49 = vset.pattern.permute.xlu0 0
    %50 = vperm.xlu0 %49, %v40
    %v51 = vpop.permute.xlu0 %50
    %54 = vset.pattern.permute.xlu0 0
    %55 = vperm.xlu0 %54, %v41
    %v56 = vpop.permute.xlu0 %55
    %59 = vset.pattern.permute.xlu0 0
    %60 = vperm.xlu0 %59, %v42
    %v61 = vpop.permute.xlu0 %60
    %64 = vset.pattern.permute.xlu0 0
    %65 = vperm.xlu0 %64, %v43
    %v66 = vpop.permute.xlu0 %65
    %69 = vset.pattern.permute.xlu0 0
    %70 = vperm.xlu0 %69, %v44
    %v71 = vpop.permute.xlu0 %70
    %74 = vset.pattern.permute.xlu0 0
    %75 = vperm.xlu0 %74, %v45
    %v76 = vpop.permute.xlu0 %75
    %79 = vset.pattern.permute.xlu0 0
    %80 = vperm.xlu0 %79, %v46
    %v81 = vpop.permute.xlu0 %80
    %84 = vset.pattern.permute.xlu0 0
    %85 = vperm.xlu0 %84, %v47
    %v86 = vpop.permute.xlu0 %85
    %vm88 = vcmask 261120
    %v90 = vsel %vm88, %v32, 0
    %v93 = vsel %vm88, %v33, 0
    %v96 = vsel %vm88, %v34, 0
    %v99 = vsel %vm88, %v35, 0
    %v102 = vsel %vm88, %v36, 0
    %v105 = vsel %vm88, %v37, 0
    %v108 = vsel %vm88, %v38, 0
    %v111 = vsel %vm88, %v39, 0
    %113 = vmatprep.subr.mxu0 0.0
    %114 = vmatpush1.msra.mxu0 %v28
    %115 = vmatprep.subr.mxu0 0.0
    %116 = vmatpush1.msra.mxu0 %v29
    %117 = vmatprep.subr.mxu0 0.0
    %118 = vmatpush1.msra.mxu0 %v30
    %119 = vmatprep.subr.mxu0 0.0
    %120 = vmatpush1.msra.mxu0 %v31
    %121 = vmatprep.subr.mxu0 0.0
    %122 = vmatpush1.msra.mxu0 0.0
    %123 = vmatprep.subr.mxu0 0.0
    %124 = vmatpush1.msra.mxu0 0.0
    %125 = vmatprep.subr.mxu0 0.0
    %126 = vmatpush1.msra.mxu0 0.0
    %127 = vmatprep.subr.mxu0 0.0
    %128 = vmatpush1.msra.mxu0 0.0
    %129 = vmatprep.subr.mxu0 0.0
    %130 = vmatpush1.msra.mxu0 0.0
    %131 = vmatprep.subr.mxu0 0.0
    %132 = vmatpush1.msra.mxu0 0.0
    %133 = vmatprep.subr.mxu0 0.0
    %134 = vmatpush1.msra.mxu0 0.0
    %135 = vmatprep.subr.mxu0 0.0
    %136 = vmatpush1.msra.mxu0 0.0
    %137 = vmatprep.subr.mxu0 0.0
    %138 = vmatpush1.msra.mxu0 0.0
    %139 = vmatprep.subr.mxu0 0.0
    %140 = vmatpush1.msra.mxu0 0.0
    %141 = vmatprep.subr.mxu0 0.0
    %142 = vmatpush1.msra.mxu0 0.0
    %143 = vmatprep.subr.mxu0 0.0
    %144 = vmatpush1.msra.mxu0 0.0
    %145 = vmatprep.subr.mxu0 0.0
    %146 = vmatpush1.msra.mxu0 0.0
    %147 = vmatprep.subr.mxu0 0.0
    %148 = vmatpush1.msra.mxu0 0.0
    %149 = vmatprep.subr.mxu0 0.0
    %150 = vmatpush1.msra.mxu0 0.0
    %151 = vmatprep.subr.mxu0 0.0
    %152 = vmatpush1.msra.mxu0 0.0
    %153 = vmatprep.subr.mxu0 0.0
    %154 = vmatpush1.msra.mxu0 0.0
    %155 = vmatprep.subr.mxu0 0.0
    %156 = vmatpush1.msra.mxu0 0.0
    %157 = vmatprep.subr.mxu0 0.0
    %158 = vmatpush1.msra.mxu0 0.0
    %159 = vmatprep.subr.mxu0 0.0
    %160 = vmatpush1.msra.mxu0 0.0
    %161 = vmatprep.subr.mxu0 0.0
    %162 = vmatpush1.msra.mxu0 0.0
    %163 = vmatprep.subr.mxu0 0.0
    %164 = vmatpush1.msra.mxu0 0.0
    %165 = vmatprep.subr.mxu0 0.0
    %166 = vmatpush1.msra.mxu0 0.0
    %167 = vmatprep.subr.mxu0 0.0
    %168 = vmatpush1.msra.mxu0 0.0
    %169 = vmatprep.subr.mxu0 0.0
    %170 = vmatpush1.msra.mxu0 0.0
    %171 = vmatprep.subr.mxu0 0.0
    %172 = vmatpush1.msra.mxu0 0.0
    %173 = vmatprep.subr.mxu0 0.0
    %174 = vmatpush1.msra.mxu0 0.0
    %175 = vmatprep.subr.mxu0 0.0
    %176 = vmatpush1.msra.mxu0 0.0
    %177 = vmatprep.mubr.f32.mxu0 0.0
    %178 = vmatmul.mubr.f32.gmra.mrb[0].mxu0 %v90
    %v179 = vpop.f32.mrb[0].mxu0
    %v180 = vadd.f32 %v51, %v179
    %v181 = vpop.f32.mrb[0].mxu0
    %182 = vmatprep.mubr.f32.mxu0 0.0
    %183 = vmatmul.mubr.f32.gmra.mrb[0].mxu0 %v93
    %v184 = vpop.f32.mrb[0].mxu0
    %v185 = vadd.f32 %v56, %v184
    %v186 = vpop.f32.mrb[0].mxu0
    %187 = vmatprep.mubr.f32.mxu0 0.0
    %188 = vmatmul.mubr.f32.gmra.mrb[0].mxu0 %v96
    %v189 = vpop.f32.mrb[0].mxu0
    %v190 = vadd.f32 %v61, %v189
    %v191 = vpop.f32.mrb[0].mxu0
    %192 = vmatprep.mubr.f32.mxu0 0.0
    %193 = vmatmul.mubr.f32.gmra.mrb[0].mxu0 %v99
    %v194 = vpop.f32.mrb[0].mxu0
    %v195 = vadd.f32 %v66, %v194
    %v196 = vpop.f32.mrb[0].mxu0
    %197 = vmatprep.mubr.f32.mxu0 0.0
    %198 = vmatmul.mubr.f32.gmra.mrb[0].mxu0 %v102
    %v199 = vpop.f32.mrb[0].mxu0
    %v200 = vadd.f32 %v71, %v199
    %v201 = vpop.f32.mrb[0].mxu0
    %202 = vmatprep.mubr.f32.mxu0 0.0
    %203 = vmatmul.mubr.f32.gmra.mrb[0].mxu0 %v105
    %v204 = vpop.f32.mrb[0].mxu0
    %v205 = vadd.f32 %v76, %v204
    %v206 = vpop.f32.mrb[0].mxu0
    %207 = vmatprep.mubr.f32.mxu0 0.0
    %208 = vmatmul.mubr.f32.gmra.mrb[0].mxu0 %v108
    %v209 = vpop.f32.mrb[0].mxu0
    %v210 = vadd.f32 %v81, %v209
    %v211 = vpop.f32.mrb[0].mxu0
    %212 = vmatprep.mubr.f32.mxu0 0.0
    %213 = vmatmul.mubr.f32.gmra.mrb[0].mxu0 %v111
    %v214 = vpop.f32.mrb[0].mxu0
    %v215 = vadd.f32 %v86, %v214
    %v216 = vpop.f32.mrb[0].mxu0
    %217 = vdwg.mxu0
    %v218 = vmax.f32 %v180, 0.0
    %v219 = vmax.f32 %v185, 0.0
    %v220 = vmax.f32 %v190, 0.0
    %v221 = vmax.f32 %v195, 0.0
    %v222 = vmax.f32 %v200, 0.0
    %v223 = vmax.f32 %v205, 0.0
    %v224 = vmax.f32 %v210, 0.0
    %v225 = vmax.f32 %v215, 0.0
    %v226 = vld [vmem:[%s3] sm:$0xff]
    %v227 = vld [vmem:[%s3 + $0x8] sm:$0xff]
    %v228 = vld [vmem:[%s3 + $0x10] sm:$0xff]
    %v229 = vld [vmem:[%s3 + $0x18] sm:$0xff]
    %v230 = vld [vmem:[%s4] sm:$0xff]
    %v231 = vld [vmem:[%s4 + $0x8] sm:$0xff]
    %v232 = vld [vmem:[%s4 + $0x10] sm:$0xff]
    %v233 = vld [vmem:[%s4 + $0x18] sm:$0xff]
    %235 = vset.pattern.permute.xlu0 0
    %236 = vperm.xlu0 %235, %v230
    %v237 = vpop.permute.xlu0 %236
    %240 = vset.pattern.permute.xlu0 0
    %241 = vperm.xlu0 %240, %v231
    %v242 = vpop.permute.xlu0 %241
    %245 = vset.pattern.permute.xlu0 0
    %246 = vperm.xlu0 %245, %v232
    %v247 = vpop.permute.xlu0 %246
    %250 = vset.pattern.permute.xlu0 0
    %251 = vperm.xlu0 %250, %v233
    %v252 = vpop.permute.xlu0 %251
    %vm254 = vcmask 523264
    %v256 = vsel %vm254, %v226, 0
    %v259 = vsel %vm254, %v227, 0
    %v262 = vsel %vm254, %v228, 0
    %v265 = vsel %vm254, %v229, 0
    %267 = vmatprep.subr.mxu0 0.0
    %268 = vmatpush1.msra.mxu0 %v218
    %269 = vmatprep.subr.mxu0 0.0
    %270 = vmatpush1.msra.mxu0 %v219
    %271 = vmatprep.subr.mxu0 0.0
    %272 = vmatpush1.msra.mxu0 %v220
    %273 = vmatprep.subr.mxu0 0.0
    %274 = vmatpush1.msra.mxu0 %v221
    %275 = vmatprep.subr.mxu0 0.0
    %276 = vmatpush1.msra.mxu0 %v222
    %277 = vmatprep.subr.mxu0 0.0
    %278 = vmatpush1.msra.mxu0 %v223
    %279 = vmatprep.subr.mxu0 0.0
    %280 = vmatpush1.msra.mxu0 %v224
    %281 = vmatprep.subr.mxu0 0.0
    %282 = vmatpush1.msra.mxu0 %v225
    %283 = vmatprep.subr.mxu0 0.0
    %284 = vmatpush1.msra.mxu0 0.0
    %285 = vmatprep.subr.mxu0 0.0
    %286 = vmatpush1.msra.mxu0 0.0
    %287 = vmatprep.subr.mxu0 0.0
    %288 = vmatpush1.msra.mxu0 0.0
    %289 = vmatprep.subr.mxu0 0.0
    %290 = vmatpush1.msra.mxu0 0.0
    %291 = vmatprep.subr.mxu0 0.0
    %292 = vmatpush1.msra.mxu0 0.0
    %293 = vmatprep.subr.mxu0 0.0
    %294 = vmatpush1.msra.mxu0 0.0
    %295 = vmatprep.subr.mxu0 0.0
    %296 = vmatpush1.msra.mxu0 0.0
    %297 = vmatprep.subr.mxu0 0.0
    %298 = vmatpush1.msra.mxu0 0.0
    %299 = vmatprep.subr.mxu0 0.0
    %300 = vmatpush1.msra.mxu0 0.0
    %301 = vmatprep.subr.mxu0 0.0
    %302 = vmatpush1.msra.mxu0 0.0
    %303 = vmatprep.subr.mxu0 0.0
    %304 = vmatpush1.msra.mxu0 0.0
    %305 = vmatprep.subr.mxu0 0.0
    %306 = vmatpush1.msra.mxu0 0.0
    %307 = vmatprep.subr.mxu0 0.0
    %308 = vmatpush1.msra.mxu0 0.0
    %309 = vmatprep.subr.mxu0 0.0
    %310 = vmatpush1.msra.mxu0 0.0
    %311 = vmatprep.subr.mxu0 0.0
    %312 = vmatpush1.msra.mxu0 0.0
    %313 = vmatprep.subr.mxu0 0.0
    %314 = vmatpush1.msra.mxu0 0.0
    %315 = vmatprep.subr.mxu0 0.0
    %316 = vmatpush1.msra.mxu0 0.0
    %317 = vmatprep.subr.mxu0 0.0
    %318 = vmatpush1.msra.mxu0 0.0
    %319 = vmatprep.subr.mxu0 0.0
    %320 = vmatpush1.msra.mxu0 0.0
    %321 = vmatprep.subr.mxu0 0.0
    %322 = vmatpush1.msra.mxu0 0.0
    %323 = vmatprep.subr.mxu0 0.0
    %324 = vmatpush1.msra.mxu0 0.0
    %325 = vmatprep.subr.mxu0 0.0
    %326 = vmatpush1.msra.mxu0 0.0
    %327 = vmatprep.subr.mxu0 0.0
    %328 = vmatpush1.msra.mxu0 0.0
    %329 = vmatprep.subr.mxu0 0.0
    %330 = vmatpush1.msra.mxu0 0.0
    %331 = vmatprep.mubr.f32.mxu0 0.0
    %332 = vmatmul.mubr.f32.gmra.mrb[0].mxu0 %v256
    %v333 = vpop.f32.mrb[0].mxu0
    %v334 = vadd.f32 %v237, %v333
    %v335 = vpop.f32.mrb[0].mxu0
    %336 = vmatprep.mubr.f32.mxu0 0.0
    %337 = vmatmul.mubr.f32.gmra.mrb[0].mxu0 %v259
    %v338 = vpop.f32.mrb[0].mxu0
    %v339 = vadd.f32 %v242, %v338
    %v340 = vpop.f32.mrb[0].mxu0
    %341 = vmatprep.mubr.f32.mxu0 0.0
    %342 = vmatmul.mubr.f32.gmra.mrb[0].mxu0 %v262
    %v343 = vpop.f32.mrb[0].mxu0
    %v344 = vadd.f32 %v247, %v343
    %v345 = vpop.f32.mrb[0].mxu0
    %346 = vmatprep.mubr.f32.mxu0 0.0
    %347 = vmatmul.mubr.f32.gmra.mrb[0].mxu0 %v265
    %v348 = vpop.f32.mrb[0].mxu0
    %v349 = vadd.f32 %v252, %v348
    %v350 = vpop.f32.mrb[0].mxu0
    %351 = vdwg.mxu0
    %v352 = vmax.f32 %v334, 0.0
    %v353 = vmax.f32 %v339, 0.0
    %v354 = vmax.f32 %v344, 0.0
    %v355 = vmax.f32 %v349, 0.0
    %v356 = vld [vmem:[%s5] sm:$0xff]
    %v357 = vld [vmem:[%s5 + $0x8] sm:$0xff]
    %v358 = vld [vmem:[%s5 + $0x10] sm:$0xff]
    %v359 = vld [vmem:[%s5 + $0x18] sm:$0xff]
    %361 = vset.pattern.permute.xlu0 0
    %362 = vperm.xlu0 %361, %v356
    %v363 = vpop.permute.xlu0 %362
    %366 = vset.pattern.permute.xlu0 0
    %367 = vperm.xlu0 %366, %v357
    %v368 = vpop.permute.xlu0 %367
    %371 = vset.pattern.permute.xlu0 0
    %372 = vperm.xlu0 %371, %v358
    %v373 = vpop.permute.xlu0 %372
    %376 = vset.pattern.permute.xlu0 0
    %377 = vperm.xlu0 %376, %v359
    %v378 = vpop.permute.xlu0 %377
    %v380 = vmul.f32 %v352, %v363
    %v381 = vmul.f32 %v353, %v368
    %v382 = vmul.f32 %v354, %v373
    %v383 = vmul.f32 %v355, %v378
    %vm384 = vcmask 64512
    %v385 = vsel %vm384, %v380, 0.0
    %v386 = vsel %vm384, %v381, 0.0
    %v387 = vadd.f32 %v385, %v386
    %v388 = vsel %vm384, %v382, 0.0
    %v389 = vadd.f32 %v387, %v388
    %v390 = vsel %vm384, %v383, 0.0
    %v391 = vadd.f32 %v389, %v390
    %v392 = vrot.slane %v391, 4
    %v393 = vadd.f32 %v391, %v392
    %v394 = vrot.slane %v393, 2
    %v395 = vadd.f32 %v393, %v394
    %v396 = vrot.slane %v395, 1
    %v397 = vadd.f32 %v395, %v396
    %s398 = sld [smem:[#allocation2]]
    %v399 = vstv %s398
    %v400 = vadd.f32 %v397, %v399
    %vm401 = vcmask 57344
    %402 = vst.msk [vmem:[#allocation3] sm:$0x1] %vm401, %v400
    // Predicated region
    $region30: #{tpu_custom_call.1} parent=1 // pred_check
      _
    $region31: #{tpu_custom_call.1} parent=1 // pred_check_branch
      %404 = sbr.rel (0) target = $region33
    $region32: #{tpu_custom_call.1} parent=1 // pred_region
      %s406 = ssub.s32 16, 16
      %407 = vsyncadd [#allocation4], %s406
      %s409 = sshll.u32 [#allocation3], 4
      %s410 = int_to_ptr.vmem [resolvable:$true] %s409
      %412 = dma.vmem_to_hbm [thread:$0]  %s410, 16, %s7, [#allocation4]
    $region33: #{tpu_custom_call.1} parent=1 // pred_fallthru
      _
    // Predicated region
    $region34: #{tpu_custom_call.1} parent=1 // pred_check
      _
    $region35: #{tpu_custom_call.1} parent=1 // pred_check_branch
      %414 = sbr.rel (0) target = $region37
    $region36: #{tpu_custom_call.1} parent=1 // pred_region
      %415 = dma.done [#allocation4], 16
    $region37: #{tpu_custom_call.1} parent=1 // pred_fallthru
      _
    %416 = vsyncpa [#allocation4], 1

</llo_original>
